<compile_context>
chip_gen: v7x
topology: tpu7x:2x2x1
jax: 0.10.0
libtpu: 0.0.40
codegen_flags: <defaults>
</compile_context>

<pallas_src>
import jax
import jax.numpy as jnp
from jax.experimental import pallas as pl
from jax.experimental.pallas import tpu as pltpu


def _round_up(x, m):
    return ((x + m - 1) // m) * m


def critic_kernel(s_ref, a_ref, w1s_ref, w1a_ref, b1_ref, w2_ref, b2_ref,
                  wq_ref, bq_ref, out_ref):
    # fc1: two MXU pushes (state part + action part) replace the input concat.
    h1 = (jnp.dot(s_ref[...], w1s_ref[...], preferred_element_type=jnp.float32)
          + jnp.dot(a_ref[...], w1a_ref[...], preferred_element_type=jnp.float32)
          + b1_ref[...])
    h1 = jnp.maximum(h1, 0.0)                       # f32 VPU (v5e has no bf16 VPU)

    # fc2: cast only the MXU operand to the weight dtype; accumulate in f32.
    h2 = jnp.dot(h1.astype(w2_ref.dtype), w2_ref[...],
                 preferred_element_type=jnp.float32) + b2_ref[...]
    h2 = jnp.maximum(h2, 0.0)

    # q head (H2 -> 1): VPU multiply + XLU reduce; scalar bias comes from SMEM.
    q = jnp.sum(h2 * wq_ref[...], axis=-1) + bq_ref[0]         # (TILE_B,)

    # Lane-dense store: batch on the lane axis -> unmasked full-lane stores.
    out_ref[...] = q[None, :].astype(out_ref.dtype)             # (1, TILE_B)


def critic_forward(state, action, params, *, tile_b=256, use_bf16=False):
    """TD3 critic forward. state: (B, input_dims), action: (B, n_actions) -> (B, 1)."""
    w1, b1, w2, b2, wq, bq = params        # w1: (input_dims + n_actions, H1), etc.
    assert tile_b % 128 == 0

    B, ds = state.shape
    da = action.shape[1]
    H1 = w1.shape[1]
    H2 = w2.shape[1]

    # Split fc1 so the kernel never needs the concatenated input.
    w1s, w1a = w1[:ds], w1[ds:]

    # Batch tile: multiple of 8 sublanes; multi-step grids use a 128-multiple so
    # both the input tiles and the lane-dense output block stay legal.
    tb = tile_b if B >= tile_b else _round_up(B, 8)
    bp = _round_up(B, tb)
    if bp != B:
        pad = bp - B
        state = jnp.pad(state, ((0, pad), (0, 0)))
        action = jnp.pad(action, ((0, pad), (0, 0)))

    mxu_dtype = jnp.bfloat16 if use_bf16 else jnp.float32
    s_x = state.astype(mxu_dtype)
    a_x = action.astype(mxu_dtype)
    w1s_x = w1s.astype(mxu_dtype)
    w1a_x = w1a.astype(mxu_dtype)
    w2_x = w2.astype(mxu_dtype)
    b1r = b1.reshape(1, H1).astype(jnp.float32)
    b2r = b2.reshape(1, H2).astype(jnp.float32)
    wqr = wq.reshape(1, H2).astype(jnp.float32)     # head weight as a row (VPU path)
    bqs = bq.reshape(1).astype(jnp.float32)         # scalar head bias -> SMEM

    operands = (s_x, a_x, w1s_x, w1a_x, b1r, w2_x, b2r, wqr, bqs)
    grid = (bp // tb,)

    flops = int(2 * bp * (ds * H1 + da * H1 + H1 * H2 + H2))
    bytes_accessed = int(sum(int(o.size) * o.dtype.itemsize for o in operands)
                         + bp * 4)

    out = pl.pallas_call(
        critic_kernel,
        out_shape=jax.ShapeDtypeStruct((1, bp), jnp.float32),
        grid=grid,
        in_specs=[
            pl.BlockSpec((tb, ds), lambda i: (i, 0)),            # state tile
            pl.BlockSpec((tb, da), lambda i: (i, 0)),            # action tile
            pl.BlockSpec((ds, H1), lambda i: (0, 0)),            # W1_state  (resident)
            pl.BlockSpec((da, H1), lambda i: (0, 0)),            # W1_action (resident)
            pl.BlockSpec((1, H1), lambda i: (0, 0)),             # b1
            pl.BlockSpec((H1, H2), lambda i: (0, 0)),            # W2        (resident)
            pl.BlockSpec((1, H2), lambda i: (0, 0)),             # b2
            pl.BlockSpec((1, H2), lambda i: (0, 0)),             # wq row
            pl.BlockSpec(memory_space=pltpu.MemorySpace.SMEM),   # bq scalar
        ],
        out_specs=pl.BlockSpec((1, tb), lambda i: (0, i)),
        compiler_params=pltpu.CompilerParams(
            dimension_semantics=("parallel",),                   # megacore on v7x
        ),
        cost_estimate=pl.CostEstimate(
            flops=flops, transcendentals=0, bytes_accessed=bytes_accessed),
    )(*operands)

    return out[0, :B].reshape(B, 1)


def init_linear(key, fan_in, fan_out):
    """PyTorch nn.Linear default init, weight already transposed to [in, out]."""
    kw, kb = jax.random.split(key)
    bound = 1.0 / jnp.sqrt(jnp.float32(fan_in))
    w = jax.random.uniform(kw, (fan_in, fan_out), jnp.float32, -bound, bound)
    b = jax.random.uniform(kb, (fan_out,), jnp.float32, -bound, bound)
    return w, b


def reference_forward(state, action, params):
    w1, b1, w2, b2, wq, bq = params
    x = jnp.concatenate([state, action], axis=1)
    h1 = jnp.maximum(x @ w1 + b1, 0.0)
    h2 = jnp.maximum(h1 @ w2 + b2, 0.0)
    return h2 @ wq + bq


if __name__ == "__main__":
    # Shapes consistent with the module: input_dims=[8], n_actions=4,
    # fc1_dims=32, fc2_dims=32.
    input_dims, n_actions, fc1_dims, fc2_dims = 8, 4, 32, 32

    key = jax.random.PRNGKey(0)
    k_s, k_a, k1, k2, k3, k_s2, k_a2 = jax.random.split(key, 7)

    w1, b1 = init_linear(k1, input_dims + n_actions, fc1_dims)
    w2, b2 = init_linear(k2, fc1_dims, fc2_dims)
    wq, bq = init_linear(k3, fc2_dims, 1)
    params = (w1, b1, w2, b2, wq, bq)

    # (1) small batch, f32 path (single grid step).
    state = jax.random.normal(k_s, (2, input_dims), jnp.float32)
    action = jax.random.normal(k_a, (2, n_actions), jnp.float32)
    q = jax.block_until_ready(critic_forward(state, action, params))
    q_ref = reference_forward(state, action, params)
    assert q.shape == (2, 1)
    assert jnp.allclose(q, q_ref, atol=1e-5, rtol=1e-5), "f32 small-batch mismatch"

    # (2) larger batch exercising the multi-step parallel batch grid + padding.
    state2 = jax.random.normal(k_s2, (384, input_dims), jnp.float32)
    action2 = jax.random.normal(k_a2, (384, n_actions), jnp.float32)
    q2 = jax.block_until_ready(critic_forward(state2, action2, params, tile_b=256))
    q2_ref = reference_forward(state2, action2, params)
    assert q2.shape == (384, 1)
    assert jnp.allclose(q2, q2_ref, atol=1e-5, rtol=1e-5), "f32 tiled-batch mismatch"

    # (3) bf16 MXU operands / f32 accumulation (v6e/v7x fast path), loose check.
    q3 = jax.block_until_ready(
        critic_forward(state2, action2, params, tile_b=256, use_bf16=True))
    assert jnp.allclose(q3, q2_ref, atol=1e-1, rtol=1e-1), "bf16 path mismatch"

    # TODO(synk): optimizer (Adam), checkpoint save/load and device placement from
    # the PyTorch module are host-side concerns, not part of the forward kernel.
    print("KERNEL_OK")
</pallas_src>

<mosaic_0001>
module attributes {stable_mosaic.version = 11 : i64} {
  func.func @critic_kernel(%arg0: i32, %arg1: memref<8x8xf32, #tpu.memory_space<vmem>>, %arg2: memref<8x4xf32, #tpu.memory_space<vmem>>, %arg3: memref<8x32xf32, #tpu.memory_space<vmem>>, %arg4: memref<4x32xf32, #tpu.memory_space<vmem>>, %arg5: memref<1x32xf32, #tpu.memory_space<vmem>>, %arg6: memref<32x32xf32, #tpu.memory_space<vmem>>, %arg7: memref<1x32xf32, #tpu.memory_space<vmem>>, %arg8: memref<1x32xf32, #tpu.memory_space<vmem>>, %arg9: memref<1xf32, #tpu.memory_space<smem>>, %arg10: memref<1x8xf32, #tpu.memory_space<vmem>>) attributes {dimension_semantics = [#tpu.dimension_semantics<parallel>], iteration_bounds = array<i64: 1>, scalar_prefetch = 0 : i64, scratch_operands = 0 : i64, tpu.core_type = #tpu.core_type<tc>, window_params = [{transform_indices = @transform_0, window_bounds = array<i64: 8, 8>}, {transform_indices = @transform_1, window_bounds = array<i64: 8, 4>}, {pipeline_mode = #tpu.pipeline_mode<synchronous>, transform_indices = @transform_2, window_bounds = array<i64: 8, 32>}, {pipeline_mode = #tpu.pipeline_mode<synchronous>, transform_indices = @transform_3, window_bounds = array<i64: 4, 32>}, {pipeline_mode = #tpu.pipeline_mode<synchronous>, transform_indices = @transform_4, window_bounds = array<i64: 1, 32>}, {pipeline_mode = #tpu.pipeline_mode<synchronous>, transform_indices = @transform_5, window_bounds = array<i64: 32, 32>}, {pipeline_mode = #tpu.pipeline_mode<synchronous>, transform_indices = @transform_6, window_bounds = array<i64: 1, 32>}, {pipeline_mode = #tpu.pipeline_mode<synchronous>, transform_indices = @transform_7, window_bounds = array<i64: 1, 32>}, {transform_indices = @transform_8, window_bounds = array<i64: 1>}, {transform_indices = @transform_9, window_bounds = array<i64: 1, 8>}]} {
    %c0 = arith.constant 0 : index
    %c0_0 = arith.constant 0 : index
    %0 = vector.load %arg1[%c0, %c0_0] : memref<8x8xf32, #tpu.memory_space<vmem>>, vector<8x8xf32>
    %c0_1 = arith.constant 0 : index
    %c0_2 = arith.constant 0 : index
    %1 = vector.load %arg3[%c0_1, %c0_2] : memref<8x32xf32, #tpu.memory_space<vmem>>, vector<8x32xf32>
    %cst = arith.constant dense<0.000000e+00> : vector<8x32xf32>
    %2 = tpu.matmul %0, %1, %cst {dimension_numbers = #tpu.dot_dimension_numbers<[1], [0], [0], [1], [0, 0, 1, 1], [], []>} : vector<8x8xf32>, vector<8x32xf32>, vector<8x32xf32> -> vector<8x32xf32>
    %c0_3 = arith.constant 0 : index
    %c0_4 = arith.constant 0 : index
    %3 = vector.load %arg2[%c0_3, %c0_4] : memref<8x4xf32, #tpu.memory_space<vmem>>, vector<8x4xf32>
    %c0_5 = arith.constant 0 : index
    %c0_6 = arith.constant 0 : index
    %4 = vector.load %arg4[%c0_5, %c0_6] : memref<4x32xf32, #tpu.memory_space<vmem>>, vector<4x32xf32>
    %cst_7 = arith.constant dense<0.000000e+00> : vector<8x32xf32>
    %5 = tpu.matmul %3, %4, %cst_7 {dimension_numbers = #tpu.dot_dimension_numbers<[1], [0], [0], [1], [0, 0, 1, 1], [], []>} : vector<8x4xf32>, vector<4x32xf32>, vector<8x32xf32> -> vector<8x32xf32>
    %6 = arith.addf %2, %5 : vector<8x32xf32>
    %c0_8 = arith.constant 0 : index
    %c0_9 = arith.constant 0 : index
    %7 = vector.load %arg5[%c0_8, %c0_9] : memref<1x32xf32, #tpu.memory_space<vmem>>, vector<1x32xf32>
    %8 = vector.broadcast %7 : vector<1x32xf32> to vector<8x32xf32>
    %9 = arith.addf %6, %8 : vector<8x32xf32>
    %cst_10 = arith.constant 0.000000e+00 : f32
    %10 = vector.broadcast %cst_10 : f32 to vector<8x32xf32>
    %11 = arith.maximumf %9, %10 : vector<8x32xf32>
    %c0_11 = arith.constant 0 : index
    %c0_12 = arith.constant 0 : index
    %12 = vector.load %arg6[%c0_11, %c0_12] : memref<32x32xf32, #tpu.memory_space<vmem>>, vector<32x32xf32>
    %cst_13 = arith.constant dense<0.000000e+00> : vector<8x32xf32>
    %13 = tpu.matmul %11, %12, %cst_13 {dimension_numbers = #tpu.dot_dimension_numbers<[1], [0], [0], [1], [0, 0, 1, 1], [], []>} : vector<8x32xf32>, vector<32x32xf32>, vector<8x32xf32> -> vector<8x32xf32>
    %c0_14 = arith.constant 0 : index
    %c0_15 = arith.constant 0 : index
    %14 = vector.load %arg7[%c0_14, %c0_15] : memref<1x32xf32, #tpu.memory_space<vmem>>, vector<1x32xf32>
    %15 = vector.broadcast %14 : vector<1x32xf32> to vector<8x32xf32>
    %16 = arith.addf %13, %15 : vector<8x32xf32>
    %cst_16 = arith.constant 0.000000e+00 : f32
    %17 = vector.broadcast %cst_16 : f32 to vector<8x32xf32>
    %18 = arith.maximumf %16, %17 : vector<8x32xf32>
    %c0_17 = arith.constant 0 : index
    %c0_18 = arith.constant 0 : index
    %19 = vector.load %arg8[%c0_17, %c0_18] : memref<1x32xf32, #tpu.memory_space<vmem>>, vector<1x32xf32>
    %20 = vector.broadcast %19 : vector<1x32xf32> to vector<8x32xf32>
    %21 = arith.mulf %18, %20 : vector<8x32xf32>
    %cst_19 = arith.constant dense<0.000000e+00> : vector<8xf32>
    %22 = vector.multi_reduction <add>, %21, %cst_19 [1] : vector<8x32xf32> to vector<8xf32>
    %c0_20 = arith.constant 0 : index
    %23 = memref.load %arg9[%c0_20] : memref<1xf32, #tpu.memory_space<smem>>
    %24 = vector.broadcast %23 : f32 to vector<8xf32>
    %25 = arith.addf %22, %24 : vector<8xf32>
    %26 = vector.shape_cast %25 : vector<8xf32> to vector<1x8xf32>
    %c0_21 = arith.constant 0 : index
    %c0_22 = arith.constant 0 : index
    %27 = vector.load %arg10[%c0_21, %c0_22] : memref<1x8xf32, #tpu.memory_space<vmem>>, vector<1x8xf32>
    tpu.vector_store %arg10[%c0_21, %c0_22], %26 {strides = array<i32>} : memref<1x8xf32, #tpu.memory_space<vmem>>, vector<1x8xf32>,
    return
  }
  func.func @transform_0(%arg0: i32) -> (i32, i32) {
    %c0_i32 = arith.constant 0 : i32
    %c0_i32_0 = arith.constant 0 : i32
    return %arg0, %c0_i32 : i32, i32
  }
  func.func @transform_1(%arg0: i32) -> (i32, i32) {
    %c0_i32 = arith.constant 0 : i32
    %c0_i32_0 = arith.constant 0 : i32
    return %arg0, %c0_i32 : i32, i32
  }
  func.func @transform_2(%arg0: i32) -> (i32, i32) {
    %c0_i32 = arith.constant 0 : i32
    %c0_i32_0 = arith.constant 0 : i32
    %c0_i32_1 = arith.constant 0 : i32
    return %c0_i32, %c0_i32_0 : i32, i32
  }
  func.func @transform_3(%arg0: i32) -> (i32, i32) {
    %c0_i32 = arith.constant 0 : i32
    %c0_i32_0 = arith.constant 0 : i32
    %c0_i32_1 = arith.constant 0 : i32
    return %c0_i32, %c0_i32_0 : i32, i32
  }
  func.func @transform_4(%arg0: i32) -> (i32, i32) {
    %c0_i32 = arith.constant 0 : i32
    %c0_i32_0 = arith.constant 0 : i32
    %c0_i32_1 = arith.constant 0 : i32
    return %c0_i32, %c0_i32_0 : i32, i32
  }
  func.func @transform_5(%arg0: i32) -> (i32, i32) {
    %c0_i32 = arith.constant 0 : i32
    %c0_i32_0 = arith.constant 0 : i32
    %c0_i32_1 = arith.constant 0 : i32
    return %c0_i32, %c0_i32_0 : i32, i32
  }
  func.func @transform_6(%arg0: i32) -> (i32, i32) {
    %c0_i32 = arith.constant 0 : i32
    %c0_i32_0 = arith.constant 0 : i32
    %c0_i32_1 = arith.constant 0 : i32
    return %c0_i32, %c0_i32_0 : i32, i32
  }
  func.func @transform_7(%arg0: i32) -> (i32, i32) {
    %c0_i32 = arith.constant 0 : i32
    %c0_i32_0 = arith.constant 0 : i32
    %c0_i32_1 = arith.constant 0 : i32
    return %c0_i32, %c0_i32_0 : i32, i32
  }
  func.func @transform_8(%arg0: i32) -> i32 {
    %c0_i32 = arith.constant 0 : i32
    %c0_i32_0 = arith.constant 0 : i32
    return %c0_i32 : i32
  }
  func.func @transform_9(%arg0: i32) -> (i32, i32) {
    %c0_i32 = arith.constant 0 : i32
    %c0_i32_0 = arith.constant 0 : i32
    return %c0_i32, %arg0 : i32, i32
  }
}

</mosaic_0001>

<llo_original>
// kernel: tpu_custom_call.1
$region0: #{tpu_custom_call.1}
  #allocation0 [shape = 'u32[]', space=smem, size = 0x4, offset = 0x4, fixed_abs, tag = 'smem constant byte address 0x4 - core index']
  #allocation1 [shape = 'u32[144,128]{1,0:T(1,128)}', space=vmem, size = 0x12000, scoped, tag = 'internal scratch']
  #allocation2 [shape = 'f32[1]{0:T(128)S(6)}', space=smem, size = 0x200, scoped, tag = 'scoped memory for tpu_custom_call.1']
  %s0 = inlined_call_operand.hbm [shape: f32[8,8], index: 0, kind: input, shape index: {}]
  %s1 = inlined_call_operand.vmem [shape: f32[8,4], index: 1, kind: input, shape index: {}]
  %s2 = inlined_call_operand.hbm [shape: f32[8,32], index: 2, kind: input, shape index: {}]
  %s3 = inlined_call_operand.hbm [shape: f32[4,32], index: 3, kind: input, shape index: {}]
  %s4 = inlined_call_operand.vmem [shape: f32[1,32], index: 4, kind: input, shape index: {}]
  %s5 = inlined_call_operand.vmem [shape: f32[32,32], index: 5, kind: input, shape index: {}]
  %s6 = inlined_call_operand.vmem [shape: f32[1,32], index: 6, kind: input, shape index: {}]
  %s7 = inlined_call_operand.vmem [shape: f32[1,32], index: 7, kind: input, shape index: {}]
  %s8 = inlined_call_operand.<no memory space> [shape: f32[1], index: 8, kind: input, shape index: {}]
  %s9 = inlined_call_operand.hbm [shape: f32[1,8], index: 9, kind: output, shape index: {}]
  %s10 = sld [smem:[#allocation0]]
  $region58: #{tpu_custom_call.1} parent=0
    _
  %s12 = ssub.s32 1, %s10
  %s13 = scalar_select 0, %s12, %s10
  %14 = sst [smem:[#allocation2]] %s8
  $region1: #{tpu_custom_call.1} parent=0
    #allocation3 [shape = 'u8[4096]{0}', space=vmem, size = 0x1000, scoped, tag = 'input window, operand 0, single buffered']
    #allocation4 [shape = 's32[1]{0}', space=sflag, size = 0x4, scoped, tag = 'scoped memory for tpu_custom_call.1']
    #allocation5 [shape = 's32[1]{0}', space=sflag, size = 0x4, scoped, tag = 'scoped memory for tpu_custom_call.1']
    #allocation6 [shape = 'u8[4096]{0}', space=vmem, size = 0x1000, scoped, tag = 'input window, operand 2, single buffered']
    #allocation7 [shape = 's32[1]{0}', space=sflag, size = 0x4, scoped, tag = 'scoped memory for tpu_custom_call.1']
    #allocation8 [shape = 'u8[2048]{0}', space=vmem, size = 0x800, scoped, tag = 'input window, operand 3, single buffered']
    #allocation9 [shape = 'u8[512]{0}', space=vmem, size = 0x400, scoped, tag = 'output window, operand 0, single buffered']
    %15 = vsyncpa [#allocation4], 0
    %16 = vsyncpa [#allocation7], 0
    %17 = vsyncpa [#allocation5], 0
    // Predicated region
    $region2: #{tpu_custom_call.1} parent=1 // pred_check
      _
    $region3: #{tpu_custom_call.1} parent=1 // pred_check_branch
      %19 = sbr.rel (0) target = $region5
    $region4: #{tpu_custom_call.1} parent=1 // pred_region
      %s21 = ssub.s32 128, 128
      %22 = vsyncadd [#allocation4], %s21
      %s24 = sshll.u32 [#allocation3], 4
      %s25 = int_to_ptr.vmem [resolvable:$true] %s24
      %27 = dma.hbm_to_vmem [thread:$0]  %s0, 128, %s25, [#allocation4]
    $region5: #{tpu_custom_call.1} parent=1 // pred_fallthru
      _
    // Predicated region
    $region6: #{tpu_custom_call.1} parent=1 // pred_check
      _
    $region7: #{tpu_custom_call.1} parent=1 // pred_check_branch
      %29 = sbr.rel (0) target = $region9
    $region8: #{tpu_custom_call.1} parent=1 // pred_region
      _
    $region9: #{tpu_custom_call.1} parent=1 // pred_fallthru
      _
    // Predicated region
    $region10: #{tpu_custom_call.1} parent=1 // pred_check
      _
    $region11: #{tpu_custom_call.1} parent=1 // pred_check_branch
      %31 = sbr.rel (0) target = $region13
    $region12: #{tpu_custom_call.1} parent=1 // pred_region
      %s33 = ssub.s32 128, 128
      %34 = vsyncadd [#allocation7], %s33
      %s36 = sshll.u32 [#allocation6], 4
      %s37 = int_to_ptr.vmem [resolvable:$true] %s36
      %39 = dma.hbm_to_vmem [thread:$0]  %s2, 128, %s37, [#allocation7]
    $region13: #{tpu_custom_call.1} parent=1 // pred_fallthru
      _
    // Predicated region
    $region14: #{tpu_custom_call.1} parent=1 // pred_check
      _
    $region15: #{tpu_custom_call.1} parent=1 // pred_check_branch
      %41 = sbr.rel (0) target = $region17
    $region16: #{tpu_custom_call.1} parent=1 // pred_region
      %s43 = ssub.s32 64, 64
      %44 = vsyncadd [#allocation7], %s43
      %s46 = sshll.u32 [#allocation8], 4
      %s47 = int_to_ptr.vmem [resolvable:$true] %s46
      %49 = dma.hbm_to_vmem [thread:$0]  %s3, 64, %s47, [#allocation7]
    $region17: #{tpu_custom_call.1} parent=1 // pred_fallthru
      _
    // Predicated region
    $region18: #{tpu_custom_call.1} parent=1 // pred_check
      _
    $region19: #{tpu_custom_call.1} parent=1 // pred_check_branch
      %51 = sbr.rel (0) target = $region21
    $region20: #{tpu_custom_call.1} parent=1 // pred_region
      _
    $region21: #{tpu_custom_call.1} parent=1 // pred_fallthru
      _
    // Predicated region
    $region22: #{tpu_custom_call.1} parent=1 // pred_check
      _
    $region23: #{tpu_custom_call.1} parent=1 // pred_check_branch
      %53 = sbr.rel (0) target = $region25
    $region24: #{tpu_custom_call.1} parent=1 // pred_region
      _
    $region25: #{tpu_custom_call.1} parent=1 // pred_fallthru
      _
    // Predicated region
    $region26: #{tpu_custom_call.1} parent=1 // pred_check
      _
    $region27: #{tpu_custom_call.1} parent=1 // pred_check_branch
      %55 = sbr.rel (0) target = $region29
    $region28: #{tpu_custom_call.1} parent=1 // pred_region
      _
    $region29: #{tpu_custom_call.1} parent=1 // pred_fallthru
      _
    // Predicated region
    $region30: #{tpu_custom_call.1} parent=1 // pred_check
      _
    $region31: #{tpu_custom_call.1} parent=1 // pred_check_branch
      %57 = sbr.rel (0) target = $region33
    $region32: #{tpu_custom_call.1} parent=1 // pred_region
      _
    $region33: #{tpu_custom_call.1} parent=1 // pred_fallthru
      _
    // Predicated region
    $region34: #{tpu_custom_call.1} parent=1 // pred_check
      _
    $region35: #{tpu_custom_call.1} parent=1 // pred_check_branch
      %59 = sbr.rel (0) target = $region37
    $region36: #{tpu_custom_call.1} parent=1 // pred_region
      _
    $region37: #{tpu_custom_call.1} parent=1 // pred_fallthru
      _
    // Predicated region
    $region38: #{tpu_custom_call.1} parent=1 // pred_check
      _
    $region39: #{tpu_custom_call.1} parent=1 // pred_check_branch
      %61 = sbr.rel (0) target = $region41
    $region40: #{tpu_custom_call.1} parent=1 // pred_region
      %62 = dma.done [#allocation4], 128
    $region41: #{tpu_custom_call.1} parent=1 // pred_fallthru
      _
    // Predicated region
    $region42: #{tpu_custom_call.1} parent=1 // pred_check
      _
    $region43: #{tpu_custom_call.1} parent=1 // pred_check_branch
      %64 = sbr.rel (0) target = $region45
    $region44: #{tpu_custom_call.1} parent=1 // pred_region
      %65 = dma.done [#allocation7], 128
    $region45: #{tpu_custom_call.1} parent=1 // pred_fallthru
      _
    // Predicated region
    $region46: #{tpu_custom_call.1} parent=1 // pred_check
      _
    $region47: #{tpu_custom_call.1} parent=1 // pred_check_branch
      %67 = sbr.rel (0) target = $region49
    $region48: #{tpu_custom_call.1} parent=1 // pred_region
      %68 = dma.done [#allocation7], 64
    $region49: #{tpu_custom_call.1} parent=1 // pred_fallthru
      _
    %v69 = vld [vmem:[#allocation3] sm:$0xff]
    %v70 = vld [vmem:[#allocation6] sm:$0xff]
    %v71 = vld [vmem:[%s1] sm:$0xff]
    %v72 = vld [vmem:[#allocation8] sm:$0xf]
    %vm73 = vcmask 31744
    %v75 = vsel %vm73, %v71, 0
    %vm77 = vcmask 1043456
    %v79 = vsel %vm77, %v72, 0
    %81 = vmatprep.subr.mxu0 0.0
    %82 = vmatpush1.msra.mxu0 %v79
    %83 = vmatprep.subr.mxu0 0.0
    %84 = vmatpush1.msra.mxu0 0.0
    %85 = vmatprep.subr.mxu0 0.0
    %86 = vmatpush1.msra.mxu0 0.0
    %87 = vmatprep.subr.mxu0 0.0
    %88 = vmatpush1.msra.mxu0 0.0
    %89 = vmatprep.subr.mxu0 0.0
    %90 = vmatpush1.msra.mxu0 0.0
    %91 = vmatprep.subr.mxu0 0.0
    %92 = vmatpush1.msra.mxu0 0.0
    %93 = vmatprep.subr.mxu0 0.0
    %94 = vmatpush1.msra.mxu0 0.0
    %95 = vmatprep.subr.mxu0 0.0
    %96 = vmatpush1.msra.mxu0 0.0
    %97 = vmatprep.subr.mxu0 0.0
    %98 = vmatpush1.msra.mxu0 0.0
    %99 = vmatprep.subr.mxu0 0.0
    %100 = vmatpush1.msra.mxu0 0.0
    %101 = vmatprep.subr.mxu0 0.0
    %102 = vmatpush1.msra.mxu0 0.0
    %103 = vmatprep.subr.mxu0 0.0
    %104 = vmatpush1.msra.mxu0 0.0
    %105 = vmatprep.subr.mxu0 0.0
    %106 = vmatpush1.msra.mxu0 0.0
    %107 = vmatprep.subr.mxu0 0.0
    %108 = vmatpush1.msra.mxu0 0.0
    %109 = vmatprep.subr.mxu0 0.0
    %110 = vmatpush1.msra.mxu0 0.0
    %111 = vmatprep.subr.mxu0 0.0
    %112 = vmatpush1.msra.mxu0 0.0
    %113 = vmatprep.subr.mxu0 0.0
    %114 = vmatpush1.msra.mxu0 0.0
    %115 = vmatprep.subr.mxu0 0.0
    %116 = vmatpush1.msra.mxu0 0.0
    %117 = vmatprep.subr.mxu0 0.0
    %118 = vmatpush1.msra.mxu0 0.0
    %119 = vmatprep.subr.mxu0 0.0
    %120 = vmatpush1.msra.mxu0 0.0
    %121 = vmatprep.subr.mxu0 0.0
    %122 = vmatpush1.msra.mxu0 0.0
    %123 = vmatprep.subr.mxu0 0.0
    %124 = vmatpush1.msra.mxu0 0.0
    %125 = vmatprep.subr.mxu0 0.0
    %126 = vmatpush1.msra.mxu0 0.0
    %127 = vmatprep.subr.mxu0 0.0
    %128 = vmatpush1.msra.mxu0 0.0
    %129 = vmatprep.subr.mxu0 0.0
    %130 = vmatpush1.msra.mxu0 0.0
    %131 = vmatprep.subr.mxu0 0.0
    %132 = vmatpush1.msra.mxu0 0.0
    %133 = vmatprep.subr.mxu0 0.0
    %134 = vmatpush1.msra.mxu0 0.0
    %135 = vmatprep.subr.mxu0 0.0
    %136 = vmatpush1.msra.mxu0 0.0
    %137 = vmatprep.subr.mxu0 0.0
    %138 = vmatpush1.msra.mxu0 0.0
    %139 = vmatprep.subr.mxu0 0.0
    %140 = vmatpush1.msra.mxu0 0.0
    %141 = vmatprep.subr.mxu0 0.0
    %142 = vmatpush1.msra.mxu0 0.0
    %143 = vmatprep.subr.mxu0 0.0
    %144 = vmatpush1.msra.mxu0 0.0
    %145 = vmatprep.mubr.f32.mxu0 0.0
    %146 = vmatmul.mubr.f32.gmra.mrb[0].mxu0 %v75
    %v147 = vpop.f32.mrb[0].mxu0
    %v148 = vadd.f32 0.0, %v147
    %v149 = vpop.f32.mrb[0].mxu0
    %150 = vdwg.mxu0
    %vm151 = vcmask 64512
    %v153 = vsel %vm151, %v69, 0
    %155 = vmatprep.subr.mxu0 0.0
    %156 = vmatpush1.msra.mxu0 %v70
    %157 = vmatprep.subr.mxu0 0.0
    %158 = vmatpush1.msra.mxu0 0.0
    %159 = vmatprep.subr.mxu0 0.0
    %160 = vmatpush1.msra.mxu0 0.0
    %161 = vmatprep.subr.mxu0 0.0
    %162 = vmatpush1.msra.mxu0 0.0
    %163 = vmatprep.subr.mxu0 0.0
    %164 = vmatpush1.msra.mxu0 0.0
    %165 = vmatprep.subr.mxu0 0.0
    %166 = vmatpush1.msra.mxu0 0.0
    %167 = vmatprep.subr.mxu0 0.0
    %168 = vmatpush1.msra.mxu0 0.0
    %169 = vmatprep.subr.mxu0 0.0
    %170 = vmatpush1.msra.mxu0 0.0
    %171 = vmatprep.subr.mxu0 0.0
    %172 = vmatpush1.msra.mxu0 0.0
    %173 = vmatprep.subr.mxu0 0.0
    %174 = vmatpush1.msra.mxu0 0.0
    %175 = vmatprep.subr.mxu0 0.0
    %176 = vmatpush1.msra.mxu0 0.0
    %177 = vmatprep.subr.mxu0 0.0
    %178 = vmatpush1.msra.mxu0 0.0
    %179 = vmatprep.subr.mxu0 0.0
    %180 = vmatpush1.msra.mxu0 0.0
    %181 = vmatprep.subr.mxu0 0.0
    %182 = vmatpush1.msra.mxu0 0.0
    %183 = vmatprep.subr.mxu0 0.0
    %184 = vmatpush1.msra.mxu0 0.0
    %185 = vmatprep.subr.mxu0 0.0
    %186 = vmatpush1.msra.mxu0 0.0
    %187 = vmatprep.subr.mxu0 0.0
    %188 = vmatpush1.msra.mxu0 0.0
    %189 = vmatprep.subr.mxu0 0.0
    %190 = vmatpush1.msra.mxu0 0.0
    %191 = vmatprep.subr.mxu0 0.0
    %192 = vmatpush1.msra.mxu0 0.0
    %193 = vmatprep.subr.mxu0 0.0
    %194 = vmatpush1.msra.mxu0 0.0
    %195 = vmatprep.subr.mxu0 0.0
    %196 = vmatpush1.msra.mxu0 0.0
    %197 = vmatprep.subr.mxu0 0.0
    %198 = vmatpush1.msra.mxu0 0.0
    %199 = vmatprep.subr.mxu0 0.0
    %200 = vmatpush1.msra.mxu0 0.0
    %201 = vmatprep.subr.mxu0 0.0
    %202 = vmatpush1.msra.mxu0 0.0
    %203 = vmatprep.subr.mxu0 0.0
    %204 = vmatpush1.msra.mxu0 0.0
    %205 = vmatprep.subr.mxu0 0.0
    %206 = vmatpush1.msra.mxu0 0.0
    %207 = vmatprep.subr.mxu0 0.0
    %208 = vmatpush1.msra.mxu0 0.0
    %209 = vmatprep.subr.mxu0 0.0
    %210 = vmatpush1.msra.mxu0 0.0
    %211 = vmatprep.subr.mxu0 0.0
    %212 = vmatpush1.msra.mxu0 0.0
    %213 = vmatprep.subr.mxu0 0.0
    %214 = vmatpush1.msra.mxu0 0.0
    %215 = vmatprep.subr.mxu0 0.0
    %216 = vmatpush1.msra.mxu0 0.0
    %217 = vmatprep.subr.mxu0 0.0
    %218 = vmatpush1.msra.mxu0 0.0
    %219 = vmatprep.mubr.f32.mxu0 0.0
    %220 = vmatmul.mubr.f32.gmra.mrb[0].mxu0 %v153
    %v221 = vpop.f32.mrb[0].mxu0
    %v222 = vadd.f32 %v148, %v221
    %v223 = vpop.f32.mrb[0].mxu0
    %224 = vdwg.mxu0
    %v225 = vld [vmem:[%s4] sm:$0x1]
    %v227 = vlaneseq
    %v228 = vshrl.u32 %v227, 7
    %v229 = vsub.s32 0, %v228
    %v230 = vrot.slane %v225, %v229
    %v232 = vadd.f32 %v222, %v230
    %v233 = vmax.f32 %v232, 0.0
    %v234 = vld [vmem:[%s5] sm:$0xff]
    %v235 = vld [vmem:[%s5 + $0x8] sm:$0xff]
    %v236 = vld [vmem:[%s5 + $0x10] sm:$0xff]
    %v237 = vld [vmem:[%s5 + $0x18] sm:$0xff]
    %v238 = vld [vmem:[%s6] sm:$0x1]
    %v240 = vlaneseq
    %v241 = vshrl.u32 %v240, 7
    %v242 = vsub.s32 0, %v241
    %v243 = vrot.slane %v238, %v242
    %vm245 = vcmask 261120
    %v247 = vsel %vm245, %v233, 0
    %249 = vmatprep.subr.mxu0 0.0
    %250 = vmatpush1.msra.mxu0 %v234
    %251 = vmatprep.subr.mxu0 0.0
    %252 = vmatpush1.msra.mxu0 %v235
    %253 = vmatprep.subr.mxu0 0.0
    %254 = vmatpush1.msra.mxu0 %v236
    %255 = vmatprep.subr.mxu0 0.0
    %256 = vmatpush1.msra.mxu0 %v237
    %257 = vmatprep.subr.mxu0 0.0
    %258 = vmatpush1.msra.mxu0 0.0
    %259 = vmatprep.subr.mxu0 0.0
    %260 = vmatpush1.msra.mxu0 0.0
    %261 = vmatprep.subr.mxu0 0.0
    %262 = vmatpush1.msra.mxu0 0.0
    %263 = vmatprep.subr.mxu0 0.0
    %264 = vmatpush1.msra.mxu0 0.0
    %265 = vmatprep.subr.mxu0 0.0
    %266 = vmatpush1.msra.mxu0 0.0
    %267 = vmatprep.subr.mxu0 0.0
    %268 = vmatpush1.msra.mxu0 0.0
    %269 = vmatprep.subr.mxu0 0.0
    %270 = vmatpush1.msra.mxu0 0.0
    %271 = vmatprep.subr.mxu0 0.0
    %272 = vmatpush1.msra.mxu0 0.0
    %273 = vmatprep.subr.mxu0 0.0
    %274 = vmatpush1.msra.mxu0 0.0
    %275 = vmatprep.subr.mxu0 0.0
    %276 = vmatpush1.msra.mxu0 0.0
    %277 = vmatprep.subr.mxu0 0.0
    %278 = vmatpush1.msra.mxu0 0.0
    %279 = vmatprep.subr.mxu0 0.0
    %280 = vmatpush1.msra.mxu0 0.0
    %281 = vmatprep.subr.mxu0 0.0
    %282 = vmatpush1.msra.mxu0 0.0
    %283 = vmatprep.subr.mxu0 0.0
    %284 = vmatpush1.msra.mxu0 0.0
    %285 = vmatprep.subr.mxu0 0.0
    %286 = vmatpush1.msra.mxu0 0.0
    %287 = vmatprep.subr.mxu0 0.0
    %288 = vmatpush1.msra.mxu0 0.0
    %289 = vmatprep.subr.mxu0 0.0
    %290 = vmatpush1.msra.mxu0 0.0
    %291 = vmatprep.subr.mxu0 0.0
    %292 = vmatpush1.msra.mxu0 0.0
    %293 = vmatprep.subr.mxu0 0.0
    %294 = vmatpush1.msra.mxu0 0.0
    %295 = vmatprep.subr.mxu0 0.0
    %296 = vmatpush1.msra.mxu0 0.0
    %297 = vmatprep.subr.mxu0 0.0
    %298 = vmatpush1.msra.mxu0 0.0
    %299 = vmatprep.subr.mxu0 0.0
    %300 = vmatpush1.msra.mxu0 0.0
    %301 = vmatprep.subr.mxu0 0.0
    %302 = vmatpush1.msra.mxu0 0.0
    %303 = vmatprep.subr.mxu0 0.0
    %304 = vmatpush1.msra.mxu0 0.0
    %305 = vmatprep.subr.mxu0 0.0
    %306 = vmatpush1.msra.mxu0 0.0
    %307 = vmatprep.subr.mxu0 0.0
    %308 = vmatpush1.msra.mxu0 0.0
    %309 = vmatprep.subr.mxu0 0.0
    %310 = vmatpush1.msra.mxu0 0.0
    %311 = vmatprep.subr.mxu0 0.0
    %312 = vmatpush1.msra.mxu0 0.0
    %313 = vmatprep.mubr.f32.mxu0 0.0
    %314 = vmatmul.mubr.f32.gmra.mrb[0].mxu0 %v247
    %v315 = vpop.f32.mrb[0].mxu0
    %v316 = vadd.f32 %v243, %v315
    %v317 = vpop.f32.mrb[0].mxu0
    %318 = vdwg.mxu0
    %v319 = vmax.f32 %v316, 0.0
    %v320 = vld [vmem:[%s7] sm:$0x1]
    %v322 = vlaneseq
    %v323 = vshrl.u32 %v322, 7
    %v324 = vsub.s32 0, %v323
    %v325 = vrot.slane %v320, %v324
    %v327 = vmul.f32 %v319, %v325
    %v328 = vsel %vm245, %v327, 0.0
    %329 = vadd.xlane.f32.xlu0 %v328
    %v330 = vpop.xlane.xlu0 %329
    %s331 = sld [smem:[#allocation2]]
    %v332 = vstv %s331
    %v333 = vadd.f32 %v330, %v332
    %v335 = vlaneseq
    %v336 = vand.u32 %v335, 127
    %v337 = vlaneseq
    %v338 = vshrl.u32 %v337, 7
    %v339 = vsub.s32 %v336, %v338
    %v340 = vrot.slane %v333, %v339
    %vm342 = vcmask 57344
    %343 = vst.msk [vmem:[#allocation9] sm:$0x1] %vm342, %v340
    // Predicated region
    $region50: #{tpu_custom_call.1} parent=1 // pred_check
      _
    $region51: #{tpu_custom_call.1} parent=1 // pred_check_branch
      %345 = sbr.rel (0) target = $region53
    $region52: #{tpu_custom_call.1} parent=1 // pred_region
      %s347 = ssub.s32 16, 16
      %348 = vsyncadd [#allocation5], %s347
      %s350 = sshll.u32 [#allocation9], 4
      %s351 = int_to_ptr.vmem [resolvable:$true] %s350
      %353 = dma.vmem_to_hbm [thread:$0]  %s351, 16, %s9, [#allocation5]
    $region53: #{tpu_custom_call.1} parent=1 // pred_fallthru
      _
    // Predicated region
    $region54: #{tpu_custom_call.1} parent=1 // pred_check
      _
    $region55: #{tpu_custom_call.1} parent=1 // pred_check_branch
      %355 = sbr.rel (0) target = $region57
    $region56: #{tpu_custom_call.1} parent=1 // pred_region
      %356 = dma.done [#allocation5], 16
    $region57: #{tpu_custom_call.1} parent=1 // pred_fallthru
      _
    %357 = vsyncpa [#allocation4], 1
    %358 = vsyncpa [#allocation7], 1
    %359 = vsyncpa [#allocation5], 1

</llo_original>
